<compile_context>
chip_gen: v7x
topology: tpu7x:2x2x1
jax: 0.10.0
libtpu: 0.0.40
codegen_flags: <defaults>
</compile_context>

<pallas_src>
import functools
import math

import jax
import jax.numpy as jnp
from jax.experimental import pallas as pl
from jax.experimental.pallas import tpu as pltpu


def _round_up(x, m):
    return -(-x // m) * m


def _pick_tile(dim, max_tile, multiple):
    """Largest multiple of `multiple` that divides `dim` and is <= max_tile.

    `dim` is guaranteed (by prep-time padding) to be a multiple of `multiple`,
    so the result is always >= `multiple`."""
    t = max(multiple, min(max_tile, dim))
    t = (t // multiple) * multiple
    while dim % t != 0:
        t -= multiple
    return t


def _random_layer_kernel(*refs, d_pads, offsets):
    """refs = (x_0, ..., x_{n-1}, w_cat, out).

    w_cat is the row-padded concatenation of all random matrices (first block
    pre-scaled by 1/D**(1/n)).  d_pads/offsets are the padded row counts and
    pack-aligned starting rows, so every slice below is a tile-aligned,
    zero-cost view.  The elementwise product is accumulated directly in the
    VMEM output block: VPU / vld / vst have large slack in this DMA/MXU-bound
    kernel, and doing so removes any vreg-pressure limit on the batch tile."""
    n = len(d_pads)
    x_refs = refs[:n]
    w_ref = refs[n]
    o_ref = refs[n + 1]

    off0, dp0 = offsets[0], d_pads[0]
    o_ref[...] = jnp.dot(x_refs[0][...], w_ref[off0:off0 + dp0, :],
                         preferred_element_type=jnp.float32)
    for i in range(1, n):
        off, dp = offsets[i], d_pads[i]
        y = jnp.dot(x_refs[i][...], w_ref[off:off + dp, :],
                    preferred_element_type=jnp.float32)
        o_ref[...] = o_ref[...] * y


def prepare_random_layer_params(random_matrices, output_dim, dtype=jnp.float32):
    """One-time parameter prep.

    Folds the 1/D**(1/n) scale into the first matrix, pads the output dim to a
    multiple of 128 (lane-dense stores), pads each matrix's rows to the
    streamed dtype's sublane pack (8 f32 / 16 bf16 / 32 int8), casts to the
    streaming dtype ONCE, and concatenates into a single tall weight."""
    n = len(random_matrices)
    scale = 1.0 / math.pow(float(output_dim), 1.0 / n)
    itemsize = jnp.dtype(dtype).itemsize
    sub = 8 * max(1, 4 // itemsize)          # 8 f32, 16 bf16, 32 int8/fp8
    D = int(output_dim)
    D_pad = _round_up(D, 128)

    blocks, dims, d_pads, offsets = [], [], [], []
    off = 0
    for i, w in enumerate(random_matrices):
        d = int(w.shape[0])
        dp = _round_up(d, sub)
        wb = jnp.asarray(w, jnp.float32)
        if i == 0:
            wb = wb * scale                   # fold the scale into the first matrix
        wb = jnp.pad(wb, ((0, dp - d), (0, D_pad - D)))   # zero rows/cols: no effect
        blocks.append(wb.astype(dtype))
        dims.append(d)
        d_pads.append(dp)
        offsets.append(off)
        off += dp
    w_cat = jnp.concatenate(blocks, axis=0)
    return w_cat, tuple(dims), tuple(d_pads), tuple(offsets), D_pad


def random_layer(input_list, w_cat, dims, d_pads, offsets, output_dim, D_pad,
                 *, tb=None, tn=None, vmem_budget_bytes=28 * 1024 * 1024):
    """Pallas implementation of RandomLayer.forward.

    Activations (tiny) are cast to w_cat.dtype so the MXU sees a homogeneous
    matmul; accumulation and the output stay f32."""
    n = len(input_list)
    assert n >= 1 and len(dims) == n and len(d_pads) == n and len(offsets) == n
    B = int(input_list[0].shape[0])
    D = int(output_dim)
    w_dtype = w_cat.dtype
    w_itemsize = jnp.dtype(w_dtype).itemsize
    sum_d_pad = int(w_cat.shape[0])

    # ---- tile selection: batch tile first (MXU rows / weight reuse), then tn.
    if tb is None:
        tb = 256 if B >= 256 else _round_up(B, 8)
    tb = max(8, _round_up(min(tb, _round_up(B, 8)), 8))
    B_pad = _round_up(B, tb)
    n_b = B_pad // tb

    def vmem_bytes(tn_):
        w_buf = 2 * sum_d_pad * tn_ * w_itemsize     # double-buffered weight slab
        o_buf = 2 * tb * tn_ * 4                     # f32 output block
        x_buf = 2 * tb * sum_d_pad * w_itemsize      # all activation blocks
        return w_buf + o_buf + x_buf

    if tn is None:
        tn = _pick_tile(D_pad, 512, 128)
        # Keep >= 2 grid tiles on a parallel axis when possible (v7x megacore).
        if n_b == 1 and D_pad // tn < 2 and D_pad >= 256:
            tn = _pick_tile(D_pad, D_pad // 2, 128)
        # Cap tn so the double-buffered blocks fit the VMEM budget.
        while tn > 128 and vmem_bytes(tn) > vmem_budget_bytes:
            tn = _pick_tile(D_pad, tn - 128, 128)
    assert D_pad % tn == 0 and tn % 128 == 0
    n_c = D_pad // tn

    vmem_limit = int(min(max(32 * 1024 * 1024, vmem_bytes(tn) + 8 * 1024 * 1024),
                         56 * 1024 * 1024))

    # ---- pad activations: rows to B_pad, columns to the padded weight rows.
    xs = []
    for i, x in enumerate(input_list):
        xp = jnp.pad(x.astype(w_dtype),
                     ((0, B_pad - B), (0, d_pads[i] - dims[i])))
        xs.append(xp)

    # ---- grid: column tiles outer, batch tiles INNER -> weight block index
    # (0, j) is constant across the inner loop, so w_cat streams from HBM once.
    grid = (n_c, n_b)
    in_specs = [pl.BlockSpec((tb, d_pads[i]), lambda j, b: (b, 0))
                for i in range(n)]
    in_specs.append(pl.BlockSpec((sum_d_pad, tn), lambda j, b: (0, j)))
    out_spec = pl.BlockSpec((tb, tn), lambda j, b: (b, j))

    kernel = functools.partial(_random_layer_kernel,
                               d_pads=tuple(d_pads), offsets=tuple(offsets))

    bytes_w = sum_d_pad * D_pad * w_itemsize                    # read exactly once
    bytes_x = sum(int(x.size) * w_itemsize for x in xs) * n_c   # re-read per column tile
    bytes_o = B_pad * D_pad * 4
    flops = 2 * B_pad * sum_d_pad * D_pad

    out = pl.pallas_call(
        kernel,
        out_shape=jax.ShapeDtypeStruct((B_pad, D_pad), jnp.float32),
        grid=grid,
        in_specs=in_specs,
        out_specs=out_spec,
        compiler_params=pltpu.CompilerParams(
            dimension_semantics=("parallel", "parallel"),
            vmem_limit_bytes=vmem_limit),
        cost_estimate=pl.CostEstimate(
            flops=flops, transcendentals=0,
            bytes_accessed=bytes_w + bytes_x + bytes_o),
    )(*xs, w_cat)

    if B_pad != B or D_pad != D:
        out = out[:B, :D]
    return out


if __name__ == "__main__":
    # Small shapes consistent with RandomLayer(input_dim_list=[32, 64], output_dim=256)
    B = 8
    input_dim_list = [32, 64]
    output_dim = 256
    n = len(input_dim_list)
    scale = 1.0 / math.pow(float(output_dim), 1.0 / n)

    key = jax.random.PRNGKey(0)
    keys = jax.random.split(key, 2 * n)

    # Deterministic "random_matrix" parameters (torch.randn-equivalent shapes)
    random_matrices = [
        jax.random.normal(keys[i], (input_dim_list[i], output_dim), dtype=jnp.float32)
        for i in range(n)
    ]
    # Example inputs
    input_list = [
        jax.random.normal(keys[n + i], (B, input_dim_list[i]), dtype=jnp.float32)
        for i in range(n)
    ]

    # --- f32 weights: matches the PyTorch-equivalent reference ---
    w_cat, dims, d_pads, offsets, D_pad = prepare_random_layer_params(
        random_matrices, output_dim, dtype=jnp.float32)
    out = jax.block_until_ready(
        random_layer(input_list, w_cat, dims, d_pads, offsets, output_dim, D_pad))

    ref = (input_list[0] @ random_matrices[0]) * scale
    for i in range(1, n):
        ref = ref * (input_list[i] @ random_matrices[i])
    assert out.shape == (B, output_dim)
    assert jnp.allclose(out, ref, atol=1e-3, rtol=1e-3)

    # --- bf16-streamed weights (weight cast baked in at prep time, f32 acc) ---
    w_bf16, dims_b, d_pads_b, offsets_b, D_pad_b = prepare_random_layer_params(
        random_matrices, output_dim, dtype=jnp.bfloat16)
    out_bf16 = jax.block_until_ready(
        random_layer(input_list, w_bf16, dims_b, d_pads_b, offsets_b,
                     output_dim, D_pad_b))
    ref_bf16 = None
    for i in range(n):
        w_i = random_matrices[i] * scale if i == 0 else random_matrices[i]
        y = jnp.dot(input_list[i].astype(jnp.bfloat16), w_i.astype(jnp.bfloat16),
                    preferred_element_type=jnp.float32)
        ref_bf16 = y if ref_bf16 is None else ref_bf16 * y
    assert jnp.allclose(out_bf16, ref_bf16, atol=1e-2, rtol=1e-2)

    print("KERNEL_OK")
</pallas_src>

<mosaic_0001>
module attributes {stable_mosaic.version = 11 : i64} {
  func.func @_random_layer_kernel(%arg0: i32, %arg1: i32, %arg2: memref<8x32xf32, #tpu.memory_space<vmem>>, %arg3: memref<8x64xf32, #tpu.memory_space<vmem>>, %arg4: memref<96x128xf32, #tpu.memory_space<vmem>>, %arg5: memref<8x128xf32, #tpu.memory_space<vmem>>) attributes {dimension_semantics = [#tpu.dimension_semantics<parallel>, #tpu.dimension_semantics<parallel>], iteration_bounds = array<i64: 2, 1>, scalar_prefetch = 0 : i64, scratch_operands = 0 : i64, tpu.core_type = #tpu.core_type<tc>, window_params = [{transform_indices = @transform_0, window_bounds = array<i64: 8, 32>}, {transform_indices = @transform_1, window_bounds = array<i64: 8, 64>}, {transform_indices = @transform_2, window_bounds = array<i64: 96, 128>}, {transform_indices = @transform_3, window_bounds = array<i64: 8, 128>}]} {
    %c0 = arith.constant 0 : index
    %c0_0 = arith.constant 0 : index
    %0 = vector.load %arg2[%c0, %c0_0] : memref<8x32xf32, #tpu.memory_space<vmem>>, vector<8x32xf32>
    %c0_1 = arith.constant 0 : index
    %c0_2 = arith.constant 0 : index
    %1 = vector.load %arg4[%c0_1, %c0_2] : memref<96x128xf32, #tpu.memory_space<vmem>>, vector<32x128xf32>
    %cst = arith.constant dense<0.000000e+00> : vector<8x128xf32>
    %2 = tpu.matmul %0, %1, %cst {dimension_numbers = #tpu.dot_dimension_numbers<[1], [0], [0], [1], [0, 0, 1, 1], [], []>} : vector<8x32xf32>, vector<32x128xf32>, vector<8x128xf32> -> vector<8x128xf32>
    %c0_3 = arith.constant 0 : index
    %c0_4 = arith.constant 0 : index
    %3 = vector.load %arg5[%c0_3, %c0_4] : memref<8x128xf32, #tpu.memory_space<vmem>>, vector<8x128xf32>
    tpu.vector_store %arg5[%c0_3, %c0_4], %2 {strides = array<i32>} : memref<8x128xf32, #tpu.memory_space<vmem>>, vector<8x128xf32>,
    %c0_5 = arith.constant 0 : index
    %c0_6 = arith.constant 0 : index
    %4 = vector.load %arg3[%c0_5, %c0_6] : memref<8x64xf32, #tpu.memory_space<vmem>>, vector<8x64xf32>
    %c32 = arith.constant 32 : index
    %c0_7 = arith.constant 0 : index
    %5 = vector.load %arg4[%c32, %c0_7] : memref<96x128xf32, #tpu.memory_space<vmem>>, vector<64x128xf32>
    %cst_8 = arith.constant dense<0.000000e+00> : vector<8x128xf32>
    %6 = tpu.matmul %4, %5, %cst_8 {dimension_numbers = #tpu.dot_dimension_numbers<[1], [0], [0], [1], [0, 0, 1, 1], [], []>} : vector<8x64xf32>, vector<64x128xf32>, vector<8x128xf32> -> vector<8x128xf32>
    %c0_9 = arith.constant 0 : index
    %c0_10 = arith.constant 0 : index
    %7 = vector.load %arg5[%c0_9, %c0_10] : memref<8x128xf32, #tpu.memory_space<vmem>>, vector<8x128xf32>
    %8 = arith.mulf %7, %6 : vector<8x128xf32>
    %c0_11 = arith.constant 0 : index
    %c0_12 = arith.constant 0 : index
    %9 = vector.load %arg5[%c0_11, %c0_12] : memref<8x128xf32, #tpu.memory_space<vmem>>, vector<8x128xf32>
    tpu.vector_store %arg5[%c0_11, %c0_12], %8 {strides = array<i32>} : memref<8x128xf32, #tpu.memory_space<vmem>>, vector<8x128xf32>,
    return
  }
  func.func @transform_0(%arg0: i32, %arg1: i32) -> (i32, i32) {
    %c0_i32 = arith.constant 0 : i32
    %c0_i32_0 = arith.constant 0 : i32
    return %arg1, %c0_i32 : i32, i32
  }
  func.func @transform_1(%arg0: i32, %arg1: i32) -> (i32, i32) {
    %c0_i32 = arith.constant 0 : i32
    %c0_i32_0 = arith.constant 0 : i32
    return %arg1, %c0_i32 : i32, i32
  }
  func.func @transform_2(%arg0: i32, %arg1: i32) -> (i32, i32) {
    %c0_i32 = arith.constant 0 : i32
    %c0_i32_0 = arith.constant 0 : i32
    return %c0_i32, %arg0 : i32, i32
  }
  func.func @transform_3(%arg0: i32, %arg1: i32) -> (i32, i32) {
    %c0_i32 = arith.constant 0 : i32
    return %arg1, %arg0 : i32, i32
  }
}

</mosaic_0001>

<llo_original>
// kernel: tpu_custom_call.1
$region0: #{tpu_custom_call.1}
  #allocation0 [shape = 'u32[]', space=smem, size = 0x4, offset = 0x4, fixed_abs, tag = 'smem constant byte address 0x4 - core index']
  #allocation1 [shape = 'u32[144,128]{1,0:T(1,128)}', space=vmem, size = 0x12000, scoped, tag = 'internal scratch']
  %s0 = inlined_call_operand.hbm [shape: f32[8,32], index: 0, kind: input, shape index: {}]
  %s1 = inlined_call_operand.hbm [shape: f32[8,64], index: 1, kind: input, shape index: {}]
  %s2 = inlined_call_operand.hbm [shape: f32[96,256], index: 2, kind: input, shape index: {}]
  %s3 = inlined_call_operand.hbm [shape: f32[8,256], index: 3, kind: output, shape index: {}]
  %s4 = sld [smem:[#allocation0]]
  $region57: #{tpu_custom_call.1} parent=0
    _
  %s6 = ssub.s32 1, %s4
  %s7 = scalar_select 0, %s6, %s4
  $region1: #{tpu_custom_call.1} parent=0
    #allocation2 [shape = 'u8[4096]{0}', space=vmem, size = 0x1000, scoped, tag = 'input window, operand 0, single buffered']
    #allocation3 [shape = 's32[2]{0}', space=sflag, size = 0x8, scoped, tag = 'scoped memory for tpu_custom_call.1']
    #allocation4 [shape = 's32[2]{0}', space=sflag, size = 0x8, scoped, tag = 'scoped memory for tpu_custom_call.1']
    #allocation5 [shape = 'u8[4096]{0}', space=vmem, size = 0x1000, scoped, tag = 'input window, operand 1, single buffered']
    #allocation6 [shape = 's32[1]{0}', space=sflag, size = 0x4, scoped, tag = 'scoped memory for tpu_custom_call.1']
    #allocation7 [shape = 'u8[98304]{0}', space=vmem, size = 0x18000, scoped, tag = 'input window, operand 2']
    #allocation8 [shape = 'u8[8192]{0}', space=vmem, size = 0x2000, scoped, tag = 'output window, operand 0']
    %8 = vsyncpa [#allocation3], 0
    %9 = vsyncpa [#allocation6], 0
    %10 = vsyncpa [#allocation4], 0
    %s11 = scalar_lea.sflag [#allocation4], 1
    %12 = vsyncpa %s11, 0
    loop: start=0, step=1, limit=4
    $region2: #{tpu_custom_call.1} parent=1 // loop_pre_header
      _
    $region3: #{tpu_custom_call.1} parent=1 // loop_header
      %s14 = sphi 0, %s18
      %p15 = scmp.ge.s32.totalorder %s14, 4
      %s21 = sphi 0, %s33
      %s22 = sphi 0, %s29
      %s23 = sphi 0, %s21
      %s24 = sphi 0, %s22
      %s25 = sphi 0, %s23
      %s26 = sphi 0, %s24
      %s36 = sphi 0, %s38
      %s39 = sphi 0, %s36
      %s40 = sphi 0, %s39
      %s56 = sphi 0, %s40
      %s62 = sphi 0, %s64
      %s65 = sphi 0, %s62
      %s66 = sphi 0, %s65
      %s82 = sphi 0, %s66
      %s88 = sphi 0, %s90
      %s91 = sphi 0, %s88
      %s92 = sphi 0, %s91
      %s108 = sphi 0, %s92
      %s116 = sphi 0, %s118
      %s119 = sphi 0, %s116
      %s120 = sphi 0, %s119
      %s136 = sphi 0, %s120
    $region4: #{tpu_custom_call.1} parent=1 // loop_header_branch
      %17 = sbr.rel (%p15) target = $region8
    $region5: #{tpu_custom_call.1} parent=1 // loop_body
      %s19 = ssub.s32 %s14, 1
      %s20 = ssub.s32 %s14, 2
      %s27 = sadd.s32 1, %s22
      %p28 = scmp.ge.s32.totalorder %s27, 1
      %s29 = scalar_select %p28, 0, %s27
      %s30 = sadd.s32 1, %s21
      %s31 = scalar_select %p28, %s30, %s21
      %p32 = scmp.ge.s32.totalorder %s31, 2
      %s33 = scalar_select %p32, 0, %s31
      %s34 = ssub.s32 %s22, %s29
      %p35 = scmp.eq.s32.totalorder %s34, 0
      %s37 = sadd.s32 %s36, 1
      %s38 = scalar_select %p35, %s36, %s37
      %p41 = pneg %p35
      %p42 = scmp.eq.s32.totalorder %s14, 1
      %p43 = por %p41, %p42
      %p44 = scmp.ne.s32.totalorder %s36, %s39
      %p45 = scmp.eq.s32.totalorder %s14, 0
      %p46 = por %p44, %p45
      %p47 = scmp.ne.s32.totalorder %s36, %s39
      %p48 = scmp.eq.s32.totalorder %s19, 1
      %p49 = por %p47, %p48
      %p50 = scmp.ne.s32.totalorder %s39, %s40
      %p51 = scmp.eq.s32.totalorder %s19, 0
      %p52 = por %p50, %p51
      %p53 = scmp.ne.s32.totalorder %s39, %s40
      %p54 = scmp.eq.s32.totalorder %s20, 1
      %p55 = por %p53, %p54
      %p57 = scmp.ne.s32.totalorder %s40, %s56
      %p58 = scmp.eq.s32.totalorder %s20, 0
      %p59 = por %p57, %p58
      %s60 = ssub.s32 %s22, %s29
      %p61 = scmp.eq.s32.totalorder %s60, 0
      %s63 = sadd.s32 %s62, 1
      %s64 = scalar_select %p61, %s62, %s63
      %p67 = pneg %p61
      %p68 = scmp.eq.s32.totalorder %s14, 1
      %p69 = por %p67, %p68
      %p70 = scmp.ne.s32.totalorder %s62, %s65
      %p71 = scmp.eq.s32.totalorder %s14, 0
      %p72 = por %p70, %p71
      %p73 = scmp.ne.s32.totalorder %s62, %s65
      %p74 = scmp.eq.s32.totalorder %s19, 1
      %p75 = por %p73, %p74
      %p76 = scmp.ne.s32.totalorder %s65, %s66
      %p77 = scmp.eq.s32.totalorder %s19, 0
      %p78 = por %p76, %p77
      %p79 = scmp.ne.s32.totalorder %s65, %s66
      %p80 = scmp.eq.s32.totalorder %s20, 1
      %p81 = por %p79, %p80
      %p83 = scmp.ne.s32.totalorder %s66, %s82
      %p84 = scmp.eq.s32.totalorder %s20, 0
      %p85 = por %p83, %p84
      %s86 = ssub.s32 %s21, %s33
      %p87 = scmp.eq.s32.totalorder %s86, 0
      %s89 = sadd.s32 %s88, 1
      %s90 = scalar_select %p87, %s88, %s89
      %p93 = pneg %p87
      %p94 = scmp.eq.s32.totalorder %s14, 1
      %p95 = por %p93, %p94
      %p96 = scmp.ne.s32.totalorder %s88, %s91
      %p97 = scmp.eq.s32.totalorder %s14, 0
      %p98 = por %p96, %p97
      %p99 = scmp.ne.s32.totalorder %s88, %s91
      %p100 = scmp.eq.s32.totalorder %s19, 1
      %p101 = por %p99, %p100
      %p102 = scmp.ne.s32.totalorder %s91, %s92
      %p103 = scmp.eq.s32.totalorder %s19, 0
      %p104 = por %p102, %p103
      %p105 = scmp.ne.s32.totalorder %s91, %s92
      %p106 = scmp.eq.s32.totalorder %s20, 1
      %p107 = por %p105, %p106
      %p109 = scmp.ne.s32.totalorder %s92, %s108
      %p110 = scmp.eq.s32.totalorder %s20, 0
      %p111 = por %p109, %p110
      %s112 = ssub.s32 %s22, %s29
      %s113 = ssub.s32 %s21, %s33
      %s114 = sor.u32 %s112, %s113
      %p115 = scmp.eq.s32.totalorder %s114, 0
      %s117 = sadd.s32 %s116, 1
      %s118 = scalar_select %p115, %s116, %s117
      %p121 = pneg %p115
      %p122 = scmp.eq.s32.totalorder %s14, 1
      %p123 = por %p121, %p122
      %p124 = scmp.ne.s32.totalorder %s116, %s119
      %p125 = scmp.eq.s32.totalorder %s14, 0
      %p126 = por %p124, %p125
      %p127 = scmp.ne.s32.totalorder %s116, %s119
      %p128 = scmp.eq.s32.totalorder %s19, 1
      %p129 = por %p127, %p128
      %p130 = scmp.ne.s32.totalorder %s119, %s120
      %p131 = scmp.eq.s32.totalorder %s19, 0
      %p132 = por %p130, %p131
      %p133 = scmp.ne.s32.totalorder %s119, %s120
      %p134 = scmp.eq.s32.totalorder %s20, 1
      %p135 = por %p133, %p134
      %p137 = scmp.ne.s32.totalorder %s120, %s136
      %p138 = scmp.eq.s32.totalorder %s20, 0
      %p139 = por %p137, %p138
      %p140 = scmp.le.s32.totalorder 1, %s14
      %p141 = scmp.lt.s32.totalorder %s14, 3
      %p142 = pnand %p140, %p141
      %p143 = pneg %p142
      // Predicated region
      $region9: #{tpu_custom_call.1} parent=5 // pred_check
        _
      $region10: #{tpu_custom_call.1} parent=5 // pred_check_branch
        %145 = sbr.rel (%p142) target = $region12
      $region11: #{tpu_custom_call.1} parent=5 // pred_region
        %s146 = ssub.s32 %s14, 1
        // Predicated region
        $region13: #{tpu_custom_call.1} parent=11 // pred_check
          %p147 = pneg %p52
        $region14: #{tpu_custom_call.1} parent=11 // pred_check_branch
          %149 = sbr.rel (%p147) target = $region16
        $region15: #{tpu_custom_call.1} parent=11 // pred_region
          %s151 = ssub.s32 128, 128
          %152 = vsyncadd [#allocation3], %s151
          %s153 = smul.addr %s24, 128
          %s154 = scalar_lea.hbm %s0, %s153
          %s156 = sshll.u32 [#allocation2], 4
          %s157 = int_to_ptr.vmem [resolvable:$true] %s156
          %159 = dma.hbm_to_vmem [thread:$0]  %s154, 128, %s157, [#allocation3]
        $region16: #{tpu_custom_call.1} parent=11 // pred_fallthru
          _
        // Predicated region
        $region17: #{tpu_custom_call.1} parent=11 // pred_check
          %p160 = pneg %p78
        $region18: #{tpu_custom_call.1} parent=11 // pred_check_branch
          %162 = sbr.rel (%p160) target = $region20
        $region19: #{tpu_custom_call.1} parent=11 // pred_region
          %s164 = ssub.s32 128, 128
          %165 = vsyncadd [#allocation6], %s164
          %s166 = smul.addr %s24, 128
          %s167 = scalar_lea.hbm %s1, %s166
          %s169 = sshll.u32 [#allocation5], 4
          %s170 = int_to_ptr.vmem [resolvable:$true] %s169
          %172 = dma.hbm_to_vmem [thread:$0]  %s167, 128, %s170, [#allocation6]
        $region20: #{tpu_custom_call.1} parent=11 // pred_fallthru
          _
      $region12: #{tpu_custom_call.1} parent=5 // pred_fallthru
        _
      %p173 = scmp.lt.s32.totalorder %s14, 2
      // Predicated region
      $region21: #{tpu_custom_call.1} parent=5 // pred_check
        %p174 = pneg %p173
      $region22: #{tpu_custom_call.1} parent=5 // pred_check_branch
        %176 = sbr.rel (%p174) target = $region24
      $region23: #{tpu_custom_call.1} parent=5 // pred_region
        // Predicated region
        $region25: #{tpu_custom_call.1} parent=23 // pred_check
          %p177 = pneg %p98
        $region26: #{tpu_custom_call.1} parent=23 // pred_check_branch
          %179 = sbr.rel (%p177) target = $region28
        $region27: #{tpu_custom_call.1} parent=23 // pred_region
          %s180 = sand.u32 %s14, 1
          %s181 = scalar_lea.sflag [#allocation3], %s180
          %s182 = sand.u32 %s88, 1
          %s183 = smul.addr %s182, 96
          %s184 = scalar_lea.vmem [#allocation7], %s183
          %s186 = ssub.s32 1536, 1536
          %187 = vsyncadd %s181, %s186
          %s188 = smul.addr %s21, 128
          %s189 = scalar_lea.hbm %s2, %s188
          %s190 = sshll.u32 %s184, 4
          %s191 = int_to_ptr.vmem [resolvable:$true] %s190
          %196 = dma.hbm_to_vmem [thread:$0]  %s189, 1536, %s191, %s181, 256, 128, 8
        $region28: #{tpu_custom_call.1} parent=23 // pred_fallthru
          _
      $region24: #{tpu_custom_call.1} parent=5 // pred_fallthru
        _
      %p197 = scmp.le.s32.totalorder 1, %s14
      %p198 = scmp.lt.s32.totalorder %s14, 3
      %p199 = pnand %p197, %p198
      %p200 = pneg %p199
      // Predicated region
      $region29: #{tpu_custom_call.1} parent=5 // pred_check
        _
      $region30: #{tpu_custom_call.1} parent=5 // pred_check_branch
        %202 = sbr.rel (%p199) target = $region32
      $region31: #{tpu_custom_call.1} parent=5 // pred_region
        %s203 = ssub.s32 %s14, 1
        // Predicated region
        $region33: #{tpu_custom_call.1} parent=31 // pred_check
          %p204 = pneg %p52
        $region34: #{tpu_custom_call.1} parent=31 // pred_check_branch
          %206 = sbr.rel (%p204) target = $region36
        $region35: #{tpu_custom_call.1} parent=31 // pred_region
          %207 = dma.done [#allocation3], 128
        $region36: #{tpu_custom_call.1} parent=31 // pred_fallthru
          _
        // Predicated region
        $region37: #{tpu_custom_call.1} parent=31 // pred_check
          %p208 = pneg %p78
        $region38: #{tpu_custom_call.1} parent=31 // pred_check_branch
          %210 = sbr.rel (%p208) target = $region40
        $region39: #{tpu_custom_call.1} parent=31 // pred_region
          %211 = dma.done [#allocation6], 128
        $region40: #{tpu_custom_call.1} parent=31 // pred_fallthru
          _
        %s212 = sand.u32 %s19, 1
        %s213 = scalar_lea.sflag [#allocation3], %s212
        %s214 = sand.u32 %s91, 1
        %s215 = smul.addr %s214, 96
        %s216 = scalar_lea.vmem [#allocation7], %s215
        // Predicated region
        $region41: #{tpu_custom_call.1} parent=31 // pred_check
          %p217 = pneg %p104
        $region42: #{tpu_custom_call.1} parent=31 // pred_check_branch
          %219 = sbr.rel (%p217) target = $region44
        $region43: #{tpu_custom_call.1} parent=31 // pred_region
          %220 = dma.done %s213, 1536
        $region44: #{tpu_custom_call.1} parent=31 // pred_fallthru
          _
        %p221 = pneg %p52
        %p222 = pneg %p49
        %p223 = pneg %p78
        %p224 = pneg %p75
        %s225 = sand.u32 %s19, 1
        %s226 = scalar_lea.sflag [#allocation3], %s225
        %s227 = sand.u32 %s91, 1
        %s228 = smul.addr %s227, 96
        %s229 = scalar_lea.vmem [#allocation7], %s228
        %p230 = pneg %p104
        %p231 = pneg %p101
        %p232 = pneg %p132
        %p233 = pneg %p129
        %s234 = sand.u32 %s119, 1
        %s235 = scalar_lea.sflag [#allocation4], %s234
        %s236 = sand.u32 %s119, 1
        %s237 = smul.addr %s236, 8
        %s238 = scalar_lea.vmem [#allocation8], %s237
        %v239 = vld [vmem:[#allocation2] sm:$0xff]
        %v240 = vld [vmem:[%s216] sm:$0xff]
        %v241 = vld [vmem:[%s216 + $0x8] sm:$0xff]
        %v242 = vld [vmem:[%s216 + $0x10] sm:$0xff]
        %v243 = vld [vmem:[%s216 + $0x18] sm:$0xff]
        %vm244 = vcmask 261120
        %v246 = vsel %vm244, %v239, 0
        %248 = vmatprep.subr.mxu0 0.0
        %249 = vmatpush1.msra.mxu0 %v240
        %250 = vmatprep.subr.mxu0 0.0
        %251 = vmatpush1.msra.mxu0 %v241
        %252 = vmatprep.subr.mxu0 0.0
        %253 = vmatpush1.msra.mxu0 %v242
        %254 = vmatprep.subr.mxu0 0.0
        %255 = vmatpush1.msra.mxu0 %v243
        %256 = vmatprep.subr.mxu0 0.0
        %257 = vmatpush1.msra.mxu0 0.0
        %258 = vmatprep.subr.mxu0 0.0
        %259 = vmatpush1.msra.mxu0 0.0
        %260 = vmatprep.subr.mxu0 0.0
        %261 = vmatpush1.msra.mxu0 0.0
        %262 = vmatprep.subr.mxu0 0.0
        %263 = vmatpush1.msra.mxu0 0.0
        %264 = vmatprep.subr.mxu0 0.0
        %265 = vmatpush1.msra.mxu0 0.0
        %266 = vmatprep.subr.mxu0 0.0
        %267 = vmatpush1.msra.mxu0 0.0
        %268 = vmatprep.subr.mxu0 0.0
        %269 = vmatpush1.msra.mxu0 0.0
        %270 = vmatprep.subr.mxu0 0.0
        %271 = vmatpush1.msra.mxu0 0.0
        %272 = vmatprep.subr.mxu0 0.0
        %273 = vmatpush1.msra.mxu0 0.0
        %274 = vmatprep.subr.mxu0 0.0
        %275 = vmatpush1.msra.mxu0 0.0
        %276 = vmatprep.subr.mxu0 0.0
        %277 = vmatpush1.msra.mxu0 0.0
        %278 = vmatprep.subr.mxu0 0.0
        %279 = vmatpush1.msra.mxu0 0.0
        %280 = vmatprep.subr.mxu0 0.0
        %281 = vmatpush1.msra.mxu0 0.0
        %282 = vmatprep.subr.mxu0 0.0
        %283 = vmatpush1.msra.mxu0 0.0
        %284 = vmatprep.subr.mxu0 0.0
        %285 = vmatpush1.msra.mxu0 0.0
        %286 = vmatprep.subr.mxu0 0.0
        %287 = vmatpush1.msra.mxu0 0.0
        %288 = vmatprep.subr.mxu0 0.0
        %289 = vmatpush1.msra.mxu0 0.0
        %290 = vmatprep.subr.mxu0 0.0
        %291 = vmatpush1.msra.mxu0 0.0
        %292 = vmatprep.subr.mxu0 0.0
        %293 = vmatpush1.msra.mxu0 0.0
        %294 = vmatprep.subr.mxu0 0.0
        %295 = vmatpush1.msra.mxu0 0.0
        %296 = vmatprep.subr.mxu0 0.0
        %297 = vmatpush1.msra.mxu0 0.0
        %298 = vmatprep.subr.mxu0 0.0
        %299 = vmatpush1.msra.mxu0 0.0
        %300 = vmatprep.subr.mxu0 0.0
        %301 = vmatpush1.msra.mxu0 0.0
        %302 = vmatprep.subr.mxu0 0.0
        %303 = vmatpush1.msra.mxu0 0.0
        %304 = vmatprep.subr.mxu0 0.0
        %305 = vmatpush1.msra.mxu0 0.0
        %306 = vmatprep.subr.mxu0 0.0
        %307 = vmatpush1.msra.mxu0 0.0
        %308 = vmatprep.subr.mxu0 0.0
        %309 = vmatpush1.msra.mxu0 0.0
        %310 = vmatprep.subr.mxu0 0.0
        %311 = vmatpush1.msra.mxu0 0.0
        %312 = vmatprep.mubr.f32.mxu0 0.0
        %313 = vmatmul.mubr.f32.gmra.mrb[0].mxu0 %v246
        %v314 = vpop.f32.mrb[0].mxu0
        %v315 = vadd.f32 0.0, %v314
        %v316 = vpop.f32.mrb[0].mxu0
        %317 = vdwg.mxu0
        %318 = vst [vmem:[%s238] sm:$0xff] %v315
        %v319 = vld [vmem:[#allocation5] sm:$0xff]
        %v320 = vld [vmem:[%s216 + $0x20] sm:$0xff]
        %v321 = vld [vmem:[%s216 + $0x28] sm:$0xff]
        %v322 = vld [vmem:[%s216 + $0x30] sm:$0xff]
        %v323 = vld [vmem:[%s216 + $0x38] sm:$0xff]
        %v324 = vld [vmem:[%s216 + $0x40] sm:$0xff]
        %v325 = vld [vmem:[%s216 + $0x48] sm:$0xff]
        %v326 = vld [vmem:[%s216 + $0x50] sm:$0xff]
        %v327 = vld [vmem:[%s216 + $0x58] sm:$0xff]
        %vm328 = vcmask 523264
        %v330 = vsel %vm328, %v319, 0
        %332 = vmatprep.subr.mxu0 0.0
        %333 = vmatpush1.msra.mxu0 %v320
        %334 = vmatprep.subr.mxu0 0.0
        %335 = vmatpush1.msra.mxu0 %v321
        %336 = vmatprep.subr.mxu0 0.0
        %337 = vmatpush1.msra.mxu0 %v322
        %338 = vmatprep.subr.mxu0 0.0
        %339 = vmatpush1.msra.mxu0 %v323
        %340 = vmatprep.subr.mxu0 0.0
        %341 = vmatpush1.msra.mxu0 %v324
        %342 = vmatprep.subr.mxu0 0.0
        %343 = vmatpush1.msra.mxu0 %v325
        %344 = vmatprep.subr.mxu0 0.0
        %345 = vmatpush1.msra.mxu0 %v326
        %346 = vmatprep.subr.mxu0 0.0
        %347 = vmatpush1.msra.mxu0 %v327
        %348 = vmatprep.subr.mxu0 0.0
        %349 = vmatpush1.msra.mxu0 0.0
        %350 = vmatprep.subr.mxu0 0.0
        %351 = vmatpush1.msra.mxu0 0.0
        %352 = vmatprep.subr.mxu0 0.0
        %353 = vmatpush1.msra.mxu0 0.0
        %354 = vmatprep.subr.mxu0 0.0
        %355 = vmatpush1.msra.mxu0 0.0
        %356 = vmatprep.subr.mxu0 0.0
        %357 = vmatpush1.msra.mxu0 0.0
        %358 = vmatprep.subr.mxu0 0.0
        %359 = vmatpush1.msra.mxu0 0.0
        %360 = vmatprep.subr.mxu0 0.0
        %361 = vmatpush1.msra.mxu0 0.0
        %362 = vmatprep.subr.mxu0 0.0
        %363 = vmatpush1.msra.mxu0 0.0
        %364 = vmatprep.subr.mxu0 0.0
        %365 = vmatpush1.msra.mxu0 0.0
        %366 = vmatprep.subr.mxu0 0.0
        %367 = vmatpush1.msra.mxu0 0.0
        %368 = vmatprep.subr.mxu0 0.0
        %369 = vmatpush1.msra.mxu0 0.0
        %370 = vmatprep.subr.mxu0 0.0
        %371 = vmatpush1.msra.mxu0 0.0
        %372 = vmatprep.subr.mxu0 0.0
        %373 = vmatpush1.msra.mxu0 0.0
        %374 = vmatprep.subr.mxu0 0.0
        %375 = vmatpush1.msra.mxu0 0.0
        %376 = vmatprep.subr.mxu0 0.0
        %377 = vmatpush1.msra.mxu0 0.0
        %378 = vmatprep.subr.mxu0 0.0
        %379 = vmatpush1.msra.mxu0 0.0
        %380 = vmatprep.subr.mxu0 0.0
        %381 = vmatpush1.msra.mxu0 0.0
        %382 = vmatprep.subr.mxu0 0.0
        %383 = vmatpush1.msra.mxu0 0.0
        %384 = vmatprep.subr.mxu0 0.0
        %385 = vmatpush1.msra.mxu0 0.0
        %386 = vmatprep.subr.mxu0 0.0
        %387 = vmatpush1.msra.mxu0 0.0
        %388 = vmatprep.subr.mxu0 0.0
        %389 = vmatpush1.msra.mxu0 0.0
        %390 = vmatprep.subr.mxu0 0.0
        %391 = vmatpush1.msra.mxu0 0.0
        %392 = vmatprep.subr.mxu0 0.0
        %393 = vmatpush1.msra.mxu0 0.0
        %394 = vmatprep.subr.mxu0 0.0
        %395 = vmatpush1.msra.mxu0 0.0
        %396 = vmatprep.mubr.f32.mxu0 0.0
        %397 = vmatmul.mubr.f32.gmra.mrb[0].mxu0 %v330
        %v398 = vpop.f32.mrb[0].mxu0
        %v399 = vadd.f32 0.0, %v398
        %v400 = vpop.f32.mrb[0].mxu0
        %401 = vdwg.mxu0
        %v402 = vld [vmem:[%s238] sm:$0xff]
        %v403 = vmul.f32 %v402, %v399
        %404 = vst [vmem:[%s238] sm:$0xff] %v403
        %s405 = sand.u32 %s119, 1
        %s406 = scalar_lea.sflag [#allocation4], %s405
        %s407 = sand.u32 %s119, 1
        %s408 = smul.addr %s407, 8
        %s409 = scalar_lea.vmem [#allocation8], %s408
        // Predicated region
        $region45: #{tpu_custom_call.1} parent=31 // pred_check
          %p410 = pneg %p129
        $region46: #{tpu_custom_call.1} parent=31 // pred_check_branch
          %412 = sbr.rel (%p410) target = $region48
        $region47: #{tpu_custom_call.1} parent=31 // pred_region
          %s414 = ssub.s32 128, 128
          %415 = vsyncadd %s406, %s414
          %s416 = smul.addr %s24, 2
          %s417 = sadd.s32 %s23, %s416
          %s418 = smul.addr %s417, 128
          %s419 = scalar_lea.hbm %s3, %s418
          %s421 = sshll.u32 %s409, 4
          %s422 = int_to_ptr.vmem [resolvable:$true] %s421
          %424 = dma.vmem_to_hbm [thread:$0]  %s422, 128, %s419, %s406
        $region48: #{tpu_custom_call.1} parent=31 // pred_fallthru
          _
      $region32: #{tpu_custom_call.1} parent=5 // pred_fallthru
        _
      %p425 = scmp.le.s32.totalorder 2, %s14
      // Predicated region
      $region49: #{tpu_custom_call.1} parent=5 // pred_check
        %p426 = pneg %p425
      $region50: #{tpu_custom_call.1} parent=5 // pred_check_branch
        %428 = sbr.rel (%p426) target = $region52
      $region51: #{tpu_custom_call.1} parent=5 // pred_region
        %s429 = ssub.s32 %s14, 2
        // Predicated region
        $region53: #{tpu_custom_call.1} parent=51 // pred_check
          %p430 = pneg %p135
        $region54: #{tpu_custom_call.1} parent=51 // pred_check_branch
          %432 = sbr.rel (%p430) target = $region56
        $region55: #{tpu_custom_call.1} parent=51 // pred_region
          %s433 = sand.u32 %s120, 1
          %s434 = scalar_lea.sflag [#allocation4], %s433
          %s435 = sand.u32 %s120, 1
          %s436 = smul.addr %s435, 8
          %s437 = scalar_lea.vmem [#allocation8], %s436
          %438 = dma.done %s434, 128
        $region56: #{tpu_custom_call.1} parent=51 // pred_fallthru
          _
      $region52: #{tpu_custom_call.1} parent=5 // pred_fallthru
        _
    $region6: #{tpu_custom_call.1} parent=1 // loop_footer
      %s18 = sadd.s32 1, %s14
    $region7: #{tpu_custom_call.1} parent=1 // loop_footer_branch
      %13 = sbr.rel target = $region3
    $region8: #{tpu_custom_call.1} parent=1 // loop_exit
      _
    %439 = vsyncpa [#allocation3], 1
    %s440 = scalar_lea.sflag [#allocation3], 1
    %441 = vsyncpa %s440, 1
    %442 = vsyncpa [#allocation6], 1
    %443 = vsyncpa [#allocation4], 1
    %s444 = scalar_lea.sflag [#allocation4], 1
    %445 = vsyncpa %s444, 1

</llo_original>
